<compile_context>
chip_gen: v5e
topology: v5e:2x2
jax: 0.10.0
libtpu: 0.0.40
codegen_flags: <defaults>
</compile_context>

<pallas_src>
import functools
import numpy as np
import jax
import jax.numpy as jnp
from jax import lax
from jax.experimental import pallas as pl
from jax.experimental.pallas import tpu as pltpu


LANE = 128
WEIGHT_DTYPE = jnp.bfloat16        # pre-cast large weights once at init
ROW_TILE_LINEAR = 512              # cheap linears: big tiles -> near HBM roofline
ROW_TILE_RELHEAD = 256             # rel_head working set is ~10x/row of the linears
VMEM_LIMIT_RELHEAD = 64 * 1024 * 1024
RESIDENT = pl.Buffered(1)          # single-buffer grid-invariant (weight/bias) blocks


# ----------------------------- helpers ------------------------------------- #

def _round_up(x, m):
    return ((x + m - 1) // m) * m


def _pad_cols(a, mult=LANE):
    """Pad the last dim of `a` up to a multiple of `mult` with zeros (init-time only)."""
    c = a.shape[-1]
    cp = _round_up(c, mult)
    if cp == c:
        return a
    pad = [(0, 0)] * (a.ndim - 1) + [(0, cp - c)]
    return jnp.pad(a, pad)


def _row_tile_and_grid(n_rows, row_tile):
    """Row tile (multiple of 8) and 1-D grid; prefer >=2 grid steps (v7x: 2 TCs)."""
    rt = min(row_tile, _round_up(max(n_rows, 1), 8))
    while rt > 8 and pl.cdiv(n_rows, rt) < 2:
        rt = _round_up(rt // 2, 8)
    return rt, (pl.cdiv(n_rows, rt),)


# ----------------------------- Pallas kernels ------------------------------ #

def _ctx_head_kernel(x_ref, w_ref, b_ref, obj_ref, ctx_ref, *, obj_cols):
    """[obj_logits | relu(edge_ctx)] in one f32 MXU pass, split at a lane boundary.

    Kept fully f32: the obj logits feed an argmax whose result indexes the
    frequency-bias table downstream, so we avoid bf16 tie-flips (head is tiny).
    """
    y = jnp.dot(x_ref[...], w_ref[...], preferred_element_type=jnp.float32) + b_ref[...]
    obj_ref[...] = y[:, :obj_cols]
    ctx_ref[...] = jnp.maximum(y[:, obj_cols:], 0.0)


def _post_emb_kernel(x_ref, w_ref, b_ref, head_ref, tail_ref, *, split_col):
    """relu(x @ W_post_emb + b) emitted as two lane-aligned outputs (head | tail)."""
    x = x_ref[...].astype(w_ref.dtype)                       # bf16 right before MXU
    y = jnp.dot(x, w_ref[...], preferred_element_type=jnp.float32) + b_ref[...]
    y = jnp.maximum(y, 0.0)                                  # f32 epilogue
    head_ref[...] = y[:, :split_col]
    tail_ref[...] = y[:, split_col:]


def _rel_head_kernel(p_ref, u_ref, fb_ref, wc_ref, bc_ref, wr_ref, br_ref, o_ref):
    """Fused post_cat -> (* union) -> rel classifier -> (+ freq bias).

    The (rows, pooling_dim) intermediate never leaves VMEM/registers.
    Weights are bf16 (pre-cast); epilogue math stays f32 (v5e-safe).
    """
    p = p_ref[...].astype(wc_ref.dtype)
    t = jnp.dot(p, wc_ref[...], preferred_element_type=jnp.float32) + bc_ref[...]
    t = t * u_ref[...]                                       # f32 epilogue
    y = jnp.dot(t.astype(wr_ref.dtype), wr_ref[...],
                preferred_element_type=jnp.float32)
    o_ref[...] = (y + br_ref[...] + fb_ref[...]).astype(o_ref.dtype)


# ----------------------------- Pallas wrappers ------------------------------ #

def _nbytes(shape, dtype):
    return int(np.prod(shape)) * jnp.dtype(dtype).itemsize


def ctx_head(x, w, b2, *, obj_cols, row_tile=ROW_TILE_LINEAR):
    """Returns (obj_logits_padded, relu_edge_ctx_padded), both lane-dense."""
    N, Din = x.shape
    Dout = w.shape[1]
    ctx_cols = Dout - obj_cols
    rt, grid = _row_tile_and_grid(N, row_tile)
    kernel = functools.partial(_ctx_head_kernel, obj_cols=obj_cols)
    cost = pl.CostEstimate(
        flops=2 * N * Din * Dout, transcendentals=0,
        bytes_accessed=(_nbytes(x.shape, x.dtype) + _nbytes(w.shape, w.dtype)
                        + _nbytes(b2.shape, b2.dtype) + _nbytes((N, Dout), jnp.float32)))
    return pl.pallas_call(
        kernel,
        out_shape=(jax.ShapeDtypeStruct((N, obj_cols), jnp.float32),
                   jax.ShapeDtypeStruct((N, ctx_cols), jnp.float32)),
        grid=grid,
        in_specs=[pl.BlockSpec((rt, Din), lambda i: (i, 0)),
                  pl.BlockSpec((Din, Dout), lambda i: (0, 0), pipeline_mode=RESIDENT),
                  pl.BlockSpec((1, Dout), lambda i: (0, 0), pipeline_mode=RESIDENT)],
        out_specs=(pl.BlockSpec((rt, obj_cols), lambda i: (i, 0)),
                   pl.BlockSpec((rt, ctx_cols), lambda i: (i, 0))),
        compiler_params=pltpu.CompilerParams(dimension_semantics=("parallel",)),
        cost_estimate=cost,
    )(x, w, b2)


def post_emb(x, w, b2, *, split_col, row_tile=ROW_TILE_LINEAR):
    """Returns (head_rep_padded, tail_rep_padded), both lane-dense."""
    N, Din = x.shape
    Dout = w.shape[1]
    rt, grid = _row_tile_and_grid(N, row_tile)
    kernel = functools.partial(_post_emb_kernel, split_col=split_col)
    cost = pl.CostEstimate(
        flops=2 * N * Din * Dout, transcendentals=0,
        bytes_accessed=(_nbytes(x.shape, x.dtype) + _nbytes(w.shape, w.dtype)
                        + _nbytes(b2.shape, b2.dtype) + _nbytes((N, Dout), jnp.float32)))
    return pl.pallas_call(
        kernel,
        out_shape=(jax.ShapeDtypeStruct((N, split_col), jnp.float32),
                   jax.ShapeDtypeStruct((N, Dout - split_col), jnp.float32)),
        grid=grid,
        in_specs=[pl.BlockSpec((rt, Din), lambda i: (i, 0)),
                  pl.BlockSpec((Din, Dout), lambda i: (0, 0), pipeline_mode=RESIDENT),
                  pl.BlockSpec((1, Dout), lambda i: (0, 0), pipeline_mode=RESIDENT)],
        out_specs=(pl.BlockSpec((rt, split_col), lambda i: (i, 0)),
                   pl.BlockSpec((rt, Dout - split_col), lambda i: (i, 0))),
        compiler_params=pltpu.CompilerParams(dimension_semantics=("parallel",)),
        cost_estimate=cost,
    )(x, w, b2)


def rel_head(prod_rep, union, fb, w_cat, b_cat2, w_rel, b_rel2,
             *, row_tile=ROW_TILE_RELHEAD):
    """rel_dists = ((prod_rep @ W_cat + b_cat) * union) @ W_rel + b_rel + fb."""
    R, Dh2 = prod_rep.shape
    Dp = w_cat.shape[1]
    Dr = w_rel.shape[1]
    rt, grid = _row_tile_and_grid(R, row_tile)
    cost = pl.CostEstimate(
        flops=2 * R * Dh2 * Dp + 2 * R * Dp * Dr, transcendentals=0,
        bytes_accessed=(_nbytes(prod_rep.shape, prod_rep.dtype)
                        + _nbytes(union.shape, union.dtype)
                        + _nbytes(fb.shape, fb.dtype)
                        + _nbytes(w_cat.shape, w_cat.dtype)
                        + _nbytes(b_cat2.shape, b_cat2.dtype)
                        + _nbytes(w_rel.shape, w_rel.dtype)
                        + _nbytes(b_rel2.shape, b_rel2.dtype)
                        + _nbytes((R, Dr), jnp.float32)))
    return pl.pallas_call(
        _rel_head_kernel,
        out_shape=jax.ShapeDtypeStruct((R, Dr), jnp.float32),
        grid=grid,
        in_specs=[pl.BlockSpec((rt, Dh2), lambda i: (i, 0)),     # prod_rep rows
                  pl.BlockSpec((rt, Dp), lambda i: (i, 0)),      # union rows
                  pl.BlockSpec((rt, Dr), lambda i: (i, 0)),      # freq-bias rows
                  pl.BlockSpec((Dh2, Dp), lambda i: (0, 0), pipeline_mode=RESIDENT),
                  pl.BlockSpec((1, Dp), lambda i: (0, 0), pipeline_mode=RESIDENT),
                  pl.BlockSpec((Dp, Dr), lambda i: (0, 0), pipeline_mode=RESIDENT),
                  pl.BlockSpec((1, Dr), lambda i: (0, 0), pipeline_mode=RESIDENT)],
        out_specs=pl.BlockSpec((rt, Dr), lambda i: (i, 0)),
        compiler_params=pltpu.CompilerParams(
            dimension_semantics=("parallel",),
            vmem_limit_bytes=VMEM_LIMIT_RELHEAD),
        cost_estimate=cost,
    )(prod_rep, union, fb, w_cat, b_cat2, w_rel, b_rel2)


# ------------------------- parameter initialization ------------------------ #

def _xavier(key, fan_in, fan_out):
    bound = float(np.sqrt(6.0 / (fan_in + fan_out)))
    return jax.random.uniform(key, (fan_in, fan_out), jnp.float32, -bound, bound)


def _normal(key, fan_in, fan_out, std):
    return std * jax.random.normal(key, (fan_in, fan_out), dtype=jnp.float32)


def init_params(key, *, in_channels, hidden_dim, pooling_dim,
                num_obj_cls, group_out_sizes):
    ks = jax.random.split(key, 16)
    p = {}
    cobj_p = _round_up(num_obj_cls, LANE)
    chid_p = _round_up(hidden_dim, LANE)

    # ---- synthetic context head (stands in for VCTreeLSTMContext), kept f32 ----
    w_obj = _pad_cols(_xavier(ks[0], in_channels, num_obj_cls))        # (Din, cobj_p)
    w_ctx = _pad_cols(_xavier(ks[1], in_channels, hidden_dim))         # (Din, chid_p)
    p["w_ctx_cat"] = jnp.concatenate([w_obj, w_ctx], axis=1)           # f32
    p["b_ctx_cat"] = jnp.zeros((1, cobj_p + chid_p), jnp.float32)

    # ---- post_emb: Linear(hidden, 2*hidden), normal 10/sqrt(hidden); bf16 weight.
    #      Columns split into lane-padded [head | tail] halves; rows padded to chid_p.
    w_pe = _normal(ks[2], hidden_dim, 2 * hidden_dim, 10.0 * (1.0 / hidden_dim) ** 0.5)
    w_pe_p = jnp.zeros((chid_p, 2 * chid_p), jnp.float32)
    w_pe_p = w_pe_p.at[:hidden_dim, :hidden_dim].set(w_pe[:, :hidden_dim])
    w_pe_p = w_pe_p.at[:hidden_dim, chid_p:chid_p + hidden_dim].set(w_pe[:, hidden_dim:])
    p["w_post_emb"] = w_pe_p.astype(WEIGHT_DTYPE)
    p["b_post_emb"] = jnp.zeros((1, 2 * chid_p), jnp.float32)

    # ---- post_cat: Linear(2*hidden, pooling_dim), xavier; rows rearranged to the
    #      lane-padded [head | tail] prod_rep layout; bf16 weight.
    w_pc = _xavier(ks[3], 2 * hidden_dim, pooling_dim)
    w_pc_p = jnp.zeros((2 * chid_p, pooling_dim), jnp.float32)
    w_pc_p = w_pc_p.at[:hidden_dim, :].set(w_pc[:hidden_dim])
    w_pc_p = w_pc_p.at[chid_p:chid_p + hidden_dim, :].set(w_pc[hidden_dim:])
    p["w_post_cat"] = w_pc_p.astype(WEIGHT_DTYPE)
    p["b_post_cat"] = jnp.zeros((1, pooling_dim), jnp.float32)

    # ---- per-group relation classifiers (bf16) + frequency-bias tables (f32) ----
    p["w_rel"], p["b_rel"], p["freq_bias"] = [], [], []
    for g, out_g in enumerate(group_out_sizes):
        p["w_rel"].append(
            _pad_cols(_xavier(ks[4 + g], pooling_dim, out_g)).astype(WEIGHT_DTYPE))
        p["b_rel"].append(jnp.zeros((1, _round_up(out_g, LANE)), jnp.float32))
        p["freq_bias"].append(_pad_cols(
            0.01 * jax.random.normal(ks[10 + g],
                                     (num_obj_cls * num_obj_cls, out_g),
                                     dtype=jnp.float32)))
    return p


# ------------------------------ forward (eval) ------------------------------ #

def vctree_gcl_forward(params, roi_features, union_features,
                       num_objs, num_rels, rel_pair_idxs,
                       *, hidden_dim, num_obj_cls, num_rel_cls):
    """Eval branch of VCTree_GCL.forward.  Returns (obj_dists, rel_dists, add_losses)."""
    cobj_p = _round_up(num_obj_cls, LANE)

    # ---- fused context head: obj logits + relu(edge_ctx) as two lane-dense outputs ----
    obj_pad, edge_ctx = ctx_head(roi_features, params["w_ctx_cat"], params["b_ctx_cat"],
                                 obj_cols=cobj_p)
    obj_dists = obj_pad[:, :num_obj_cls]
    # object predictions: argmax over foreground classes (index 0 = background)
    obj_preds = jnp.argmax(obj_pad[:, 1:num_obj_cls], axis=-1).astype(jnp.int32) + 1

    # ---- edge_rep = relu(post_emb(edge_ctx)) emitted directly as head/tail halves ----
    chid_p = edge_ctx.shape[1]
    head_rep, tail_rep = post_emb(edge_ctx, params["w_post_emb"], params["b_post_emb"],
                                  split_col=chid_p)

    # ---- per-image pair gather (plain-JAX glue; see TODO about in-kernel fusion) ----
    prod_reps, pair_preds = [], []
    offset = 0
    for n_obj, pair_idx in zip(num_objs, rel_pair_idxs):
        h = head_rep[offset:offset + n_obj]
        t = tail_rep[offset:offset + n_obj]
        op = obj_preds[offset:offset + n_obj]
        prod_reps.append(jnp.concatenate([h[pair_idx[:, 0]], t[pair_idx[:, 1]]], axis=-1))
        pair_preds.append(jnp.stack([op[pair_idx[:, 0]], op[pair_idx[:, 1]]], axis=1))
        offset += n_obj
    prod_rep = jnp.concatenate(prod_reps, axis=0)          # (R_total, 2*chid_p)
    pair_pred = jnp.concatenate(pair_preds, axis=0)        # (R_total, 2)

    # ---- frequency bias rows (lane-padded table; gather is plain JAX) ----
    fb_idx = pair_pred[:, 0] * num_obj_cls + pair_pred[:, 1]
    fb = params["freq_bias"][-1][fb_idx]                   # (R_total, padded num_rel)

    # ---- fused: post_cat * union_features -> last group classifier + freq bias ----
    # pooling_dim == MLP_HEAD_DIM here -> union_single_not_match is False (no up_dim).
    rel_dists = rel_head(prod_rep, union_features, fb,
                         params["w_post_cat"], params["b_post_cat"],
                         params["w_rel"][-1], params["b_rel"][-1])
    rel_dists = rel_dists[:, :num_rel_cls]

    # ---- split back per image ----
    rel_splits = np.cumsum(num_rels)[:-1].tolist()
    obj_splits = np.cumsum(num_objs)[:-1].tolist()
    rel_dists_list = jnp.split(rel_dists, rel_splits, axis=0)
    obj_dists_list = jnp.split(obj_dists, obj_splits, axis=0)
    add_losses = {}
    return obj_dists_list, rel_dists_list, add_losses


# ---------------------------------- main ----------------------------------- #

if __name__ == "__main__":
    # Small, module-consistent shapes.
    in_channels = 64        # ROI feature dim
    hidden_dim = 32         # CONTEXT_HIDDEN_DIM
    pooling_dim = 64        # CONTEXT_POOLING_DIM == MLP_HEAD_DIM (no up_dim)
    num_obj_cls = 11        # bg + 10 object classes
    # GCL group splits (cumulative predicate counts); classifier g outputs (count+1).
    max_group_element_number_list = [4, 8, 12, 16, 20]      # last == num_rel_cls - 1
    group_out_sizes = [c + 1 for c in max_group_element_number_list]
    num_rel_cls = group_out_sizes[-1]

    num_objs = [5, 3]       # proposals per image
    num_rels = [6, 4]       # relation pairs per image
    N_total = sum(num_objs)
    R_total = sum(num_rels)

    key = jax.random.PRNGKey(0)
    k_par, k_roi, k_uni, k_p0, k_p1 = jax.random.split(key, 5)

    params = init_params(k_par,
                         in_channels=in_channels, hidden_dim=hidden_dim,
                         pooling_dim=pooling_dim, num_obj_cls=num_obj_cls,
                         group_out_sizes=group_out_sizes)

    roi_features = jax.random.normal(k_roi, (N_total, in_channels), jnp.float32)
    union_features = jax.random.normal(k_uni, (R_total, pooling_dim), jnp.float32)
    rel_pair_idxs = [
        jax.random.randint(k_p0, (num_rels[0], 2), 0, num_objs[0], dtype=jnp.int32),
        jax.random.randint(k_p1, (num_rels[1], 2), 0, num_objs[1], dtype=jnp.int32),
    ]

    obj_dists, rel_dists, add_losses = vctree_gcl_forward(
        params, roi_features, union_features, num_objs, num_rels, rel_pair_idxs,
        hidden_dim=hidden_dim, num_obj_cls=num_obj_cls, num_rel_cls=num_rel_cls)

    for t in obj_dists + rel_dists:
        jax.block_until_ready(t)

    assert [t.shape for t in obj_dists] == [(5, num_obj_cls), (3, num_obj_cls)]
    assert [t.shape for t in rel_dists] == [(6, num_rel_cls), (4, num_rel_cls)]
    assert add_losses == {}
    assert all(bool(jnp.all(jnp.isfinite(t))) for t in obj_dists + rel_dists)
    print("KERNEL_OK")
</pallas_src>

<mosaic_0001>
module attributes {stable_mosaic.version = 11 : i64} {
  func.func @_ctx_head_kernel(%arg0: i32, %arg1: memref<8x64xf32, #tpu.memory_space<vmem>>, %arg2: memref<64x256xf32, #tpu.memory_space<vmem>>, %arg3: memref<1x256xf32, #tpu.memory_space<vmem>>, %arg4: memref<8x128xf32, #tpu.memory_space<vmem>>, %arg5: memref<8x128xf32, #tpu.memory_space<vmem>>) attributes {dimension_semantics = [#tpu.dimension_semantics<parallel>], iteration_bounds = array<i64: 1>, scalar_prefetch = 0 : i64, scratch_operands = 0 : i64, tpu.core_type = #tpu.core_type<tc>, window_params = [{transform_indices = @transform_0, window_bounds = array<i64: 8, 64>}, {pipeline_mode = #tpu.pipeline_mode<synchronous>, transform_indices = @transform_1, window_bounds = array<i64: 64, 256>}, {pipeline_mode = #tpu.pipeline_mode<synchronous>, transform_indices = @transform_2, window_bounds = array<i64: 1, 256>}, {transform_indices = @transform_3, window_bounds = array<i64: 8, 128>}, {transform_indices = @transform_4, window_bounds = array<i64: 8, 128>}]} {
    %c0 = arith.constant 0 : index
    %c0_0 = arith.constant 0 : index
    %0 = vector.load %arg1[%c0, %c0_0] : memref<8x64xf32, #tpu.memory_space<vmem>>, vector<8x64xf32>
    %c0_1 = arith.constant 0 : index
    %c0_2 = arith.constant 0 : index
    %1 = vector.load %arg2[%c0_1, %c0_2] : memref<64x256xf32, #tpu.memory_space<vmem>>, vector<64x256xf32>
    %cst = arith.constant dense<0.000000e+00> : vector<8x256xf32>
    %2 = tpu.matmul %0, %1, %cst {dimension_numbers = #tpu.dot_dimension_numbers<[1], [0], [0], [1], [0, 0, 1, 1], [], []>} : vector<8x64xf32>, vector<64x256xf32>, vector<8x256xf32> -> vector<8x256xf32>
    %c0_3 = arith.constant 0 : index
    %c0_4 = arith.constant 0 : index
    %3 = vector.load %arg3[%c0_3, %c0_4] : memref<1x256xf32, #tpu.memory_space<vmem>>, vector<1x256xf32>
    %4 = vector.broadcast %3 : vector<1x256xf32> to vector<8x256xf32>
    %5 = arith.addf %2, %4 : vector<8x256xf32>
    %6 = vector.extract_strided_slice %5 {offsets = [0, 0], sizes = [8, 128], strides = [1, 1]} : vector<8x256xf32> to vector<8x128xf32>
    %c0_5 = arith.constant 0 : index
    %c0_6 = arith.constant 0 : index
    %7 = vector.load %arg4[%c0_5, %c0_6] : memref<8x128xf32, #tpu.memory_space<vmem>>, vector<8x128xf32>
    tpu.vector_store %arg4[%c0_5, %c0_6], %6 {strides = array<i32>} : memref<8x128xf32, #tpu.memory_space<vmem>>, vector<8x128xf32>,
    %8 = vector.extract_strided_slice %5 {offsets = [0, 128], sizes = [8, 128], strides = [1, 1]} : vector<8x256xf32> to vector<8x128xf32>
    %cst_7 = arith.constant 0.000000e+00 : f32
    %9 = vector.broadcast %cst_7 : f32 to vector<8x128xf32>
    %10 = arith.maximumf %8, %9 : vector<8x128xf32>
    %c0_8 = arith.constant 0 : index
    %c0_9 = arith.constant 0 : index
    %11 = vector.load %arg5[%c0_8, %c0_9] : memref<8x128xf32, #tpu.memory_space<vmem>>, vector<8x128xf32>
    tpu.vector_store %arg5[%c0_8, %c0_9], %10 {strides = array<i32>} : memref<8x128xf32, #tpu.memory_space<vmem>>, vector<8x128xf32>,
    return
  }
  func.func @transform_0(%arg0: i32) -> (i32, i32) {
    %c0_i32 = arith.constant 0 : i32
    %c0_i32_0 = arith.constant 0 : i32
    return %arg0, %c0_i32 : i32, i32
  }
  func.func @transform_1(%arg0: i32) -> (i32, i32) {
    %c0_i32 = arith.constant 0 : i32
    %c0_i32_0 = arith.constant 0 : i32
    %c0_i32_1 = arith.constant 0 : i32
    return %c0_i32, %c0_i32_0 : i32, i32
  }
  func.func @transform_2(%arg0: i32) -> (i32, i32) {
    %c0_i32 = arith.constant 0 : i32
    %c0_i32_0 = arith.constant 0 : i32
    %c0_i32_1 = arith.constant 0 : i32
    return %c0_i32, %c0_i32_0 : i32, i32
  }
  func.func @transform_3(%arg0: i32) -> (i32, i32) {
    %c0_i32 = arith.constant 0 : i32
    %c0_i32_0 = arith.constant 0 : i32
    return %arg0, %c0_i32 : i32, i32
  }
  func.func @transform_4(%arg0: i32) -> (i32, i32) {
    %c0_i32 = arith.constant 0 : i32
    %c0_i32_0 = arith.constant 0 : i32
    return %arg0, %c0_i32 : i32, i32
  }
}

</mosaic_0001>

<llo_original>
// kernel: tpu_custom_call.1
$region0: #{tpu_custom_call.1}
  #allocation0 [shape = 'u32[]', space=smem, size = 0x4, offset = 0x4, fixed_abs, tag = 'smem constant byte address 0x4 - core index']
  #allocation1 [shape = 'u32[72,128]{1,0:T(1,128)}', space=vmem, size = 0x9000, scoped, tag = 'internal scratch']
  %s0 = inlined_call_operand.hbm [shape: f32[8,64], index: 0, kind: input, shape index: {}]
  %s1 = inlined_call_operand.hbm [shape: f32[64,256], index: 1, kind: input, shape index: {}]
  %s2 = inlined_call_operand.hbm [shape: f32[1,256], index: 2, kind: input, shape index: {}]
  %s3 = inlined_call_operand.hbm [shape: f32[8,128], index: 3, kind: output, shape index: {0}]
  %s4 = inlined_call_operand.hbm [shape: f32[8,128], index: 4, kind: output, shape index: {1}]
  %5 = xla_tuple %s3, %s4
  %s6 = sld [smem:[#allocation0]]
  $region42: #{tpu_custom_call.1} parent=0
    _
  %s8 = ssub.s32 1, %s6
  %s9 = scalar_select 0, %s8, %s6
  $region1: #{tpu_custom_call.1} parent=0
    #allocation2 [shape = 'u8[4096]{0}', space=vmem, size = 0x1000, scoped, tag = 'input window, operand 0, single buffered']
    #allocation3 [shape = 's32[1]{0}', space=sflag, size = 0x4, scoped, tag = 'scoped memory for tpu_custom_call.1']
    #allocation4 [shape = 's32[1]{0}', space=sflag, size = 0x4, scoped, tag = 'scoped memory for tpu_custom_call.1']
    #allocation5 [shape = 'u8[65536]{0}', space=vmem, size = 0x10000, scoped, tag = 'input window, operand 1, single buffered']
    #allocation6 [shape = 's32[1]{0}', space=sflag, size = 0x4, scoped, tag = 'scoped memory for tpu_custom_call.1']
    #allocation7 [shape = 'u8[1024]{0}', space=vmem, size = 0x400, scoped, tag = 'input window, operand 2, single buffered']
    #allocation8 [shape = 'u8[4096]{0}', space=vmem, size = 0x1000, scoped, tag = 'output window, operand 0, single buffered']
    #allocation9 [shape = 'u8[4096]{0}', space=vmem, size = 0x1000, scoped, tag = 'output window, operand 1, single buffered']
    #allocation10 [shape = 's32[1]{0}', space=sflag, size = 0x4, scoped, tag = 'scoped memory for tpu_custom_call.1']
    %10 = vsyncpa [#allocation3], 0
    %11 = vsyncpa [#allocation6], 0
    %12 = vsyncpa [#allocation4], 0
    %13 = vsyncpa [#allocation10], 0
    // Predicated region
    $region2: #{tpu_custom_call.1} parent=1 // pred_check
      _
    $region3: #{tpu_custom_call.1} parent=1 // pred_check_branch
      %15 = sbr.rel (0) target = $region5
    $region4: #{tpu_custom_call.1} parent=1 // pred_region
      %17 = vsyncadd [#allocation3], 0
      %s19 = sshll.u32 %s0, 4
      %s20 = int_to_ptr.hbm [resolvable:$true] %s19
      %s21 = sshll.u32 [#allocation2], 4
      %s22 = int_to_ptr.vmem [resolvable:$true] %s21
      %24 = dma.hbm_to_vmem [thread:$0]  %s20, 128, %s22, [#allocation3]
    $region5: #{tpu_custom_call.1} parent=1 // pred_fallthru
      _
    // Predicated region
    $region6: #{tpu_custom_call.1} parent=1 // pred_check
      _
    $region7: #{tpu_custom_call.1} parent=1 // pred_check_branch
      %26 = sbr.rel (0) target = $region9
    $region8: #{tpu_custom_call.1} parent=1 // pred_region
      %28 = vsyncadd [#allocation6], 0
      %s29 = sshll.u32 %s1, 4
      %s30 = int_to_ptr.hbm [resolvable:$true] %s29
      %s31 = sshll.u32 [#allocation5], 4
      %s32 = int_to_ptr.vmem [resolvable:$true] %s31
      %37 = dma.hbm_to_vmem [thread:$0]  %s30, 2048, %s32, [#allocation6], 256, 256, 16
    $region9: #{tpu_custom_call.1} parent=1 // pred_fallthru
      _
    // Predicated region
    $region10: #{tpu_custom_call.1} parent=1 // pred_check
      _
    $region11: #{tpu_custom_call.1} parent=1 // pred_check_branch
      %39 = sbr.rel (0) target = $region13
    $region12: #{tpu_custom_call.1} parent=1 // pred_region
      %41 = vsyncadd [#allocation6], 0
      %s43 = sshll.u32 %s2, 4
      %s44 = int_to_ptr.hbm [resolvable:$true] %s43
      %s45 = sshll.u32 [#allocation7], 4
      %s46 = int_to_ptr.vmem [resolvable:$true] %s45
      %48 = dma.hbm_to_vmem [thread:$0]  %s44, 32, %s46, [#allocation6]
    $region13: #{tpu_custom_call.1} parent=1 // pred_fallthru
      _
    // Predicated region
    $region14: #{tpu_custom_call.1} parent=1 // pred_check
      _
    $region15: #{tpu_custom_call.1} parent=1 // pred_check_branch
      %50 = sbr.rel (0) target = $region17
    $region16: #{tpu_custom_call.1} parent=1 // pred_region
      %52 = dma.done [#allocation3], 128
    $region17: #{tpu_custom_call.1} parent=1 // pred_fallthru
      _
    // Predicated region
    $region18: #{tpu_custom_call.1} parent=1 // pred_check
      _
    $region19: #{tpu_custom_call.1} parent=1 // pred_check_branch
      %54 = sbr.rel (0) target = $region21
    $region20: #{tpu_custom_call.1} parent=1 // pred_region
      %56 = dma.done [#allocation6], 2048
    $region21: #{tpu_custom_call.1} parent=1 // pred_fallthru
      _
    // Predicated region
    $region22: #{tpu_custom_call.1} parent=1 // pred_check
      _
    $region23: #{tpu_custom_call.1} parent=1 // pred_check_branch
      %58 = sbr.rel (0) target = $region25
    $region24: #{tpu_custom_call.1} parent=1 // pred_region
      %60 = dma.done [#allocation6], 32
    $region25: #{tpu_custom_call.1} parent=1 // pred_fallthru
      _
    %v61 = vld [vmem:[#allocation2] sm:$0xff]
    %v62 = vld [vmem:[#allocation5] sm:$0xff]
    %v63 = vld [vmem:[#allocation5 + $0x8] sm:$0xff]
    %v64 = vld [vmem:[#allocation5 + $0x10] sm:$0xff]
    %v65 = vld [vmem:[#allocation5 + $0x18] sm:$0xff]
    %v66 = vld [vmem:[#allocation5 + $0x20] sm:$0xff]
    %v67 = vld [vmem:[#allocation5 + $0x28] sm:$0xff]
    %v68 = vld [vmem:[#allocation5 + $0x30] sm:$0xff]
    %v69 = vld [vmem:[#allocation5 + $0x38] sm:$0xff]
    %v70 = vld [vmem:[#allocation5 + $0x40] sm:$0xff]
    %v71 = vld [vmem:[#allocation5 + $0x48] sm:$0xff]
    %v72 = vld [vmem:[#allocation5 + $0x50] sm:$0xff]
    %v73 = vld [vmem:[#allocation5 + $0x58] sm:$0xff]
    %v74 = vld [vmem:[#allocation5 + $0x60] sm:$0xff]
    %v75 = vld [vmem:[#allocation5 + $0x68] sm:$0xff]
    %v76 = vld [vmem:[#allocation5 + $0x70] sm:$0xff]
    %v77 = vld [vmem:[#allocation5 + $0x78] sm:$0xff]
    %v78 = vld [vmem:[#allocation7] sm:$0x3]
    %v80 = vperm.slane %v78, 0
    %v81 = vperm.slane %v78, 1
    %vm84 = vcmask 523264
    %v86 = vsel %vm84, %v61, 0
    %88 = vmatpush.msra.mxu0 0.0
    %89 = vmatpush.msra.mxu0 0.0
    %90 = vmatpush.msra.mxu0 0.0
    %91 = vmatpush.msra.mxu0 0.0
    %92 = vmatpush.msra.mxu0 0.0
    %93 = vmatpush.msra.mxu0 0.0
    %94 = vmatpush.msra.mxu0 0.0
    %95 = vmatpush.msra.mxu0 0.0
    %96 = vmatpush.msra.mxu0 %v76
    %97 = vmatpush.msra.mxu0 %v74
    %98 = vmatpush.msra.mxu0 %v72
    %99 = vmatpush.msra.mxu0 %v70
    %100 = vmatpush.msra.mxu0 %v68
    %101 = vmatpush.msra.mxu0 %v66
    %102 = vmatpush.msra.mxu0 %v64
    %103 = vmatpush.msra.mxu0 %v62
    %104 = vmatmul.f32.gmra.mxu0 %v86
    %v105 = vpop.f32.mrf.mxu0
    %v106 = vadd.f32 %v80, %v105
    %107 = vdwg.mxu0
    %108 = vmatpush.msra.mxu0 0.0
    %109 = vmatpush.msra.mxu0 0.0
    %110 = vmatpush.msra.mxu0 0.0
    %111 = vmatpush.msra.mxu0 0.0
    %112 = vmatpush.msra.mxu0 0.0
    %113 = vmatpush.msra.mxu0 0.0
    %114 = vmatpush.msra.mxu0 0.0
    %115 = vmatpush.msra.mxu0 0.0
    %116 = vmatpush.msra.mxu0 %v77
    %117 = vmatpush.msra.mxu0 %v75
    %118 = vmatpush.msra.mxu0 %v73
    %119 = vmatpush.msra.mxu0 %v71
    %120 = vmatpush.msra.mxu0 %v69
    %121 = vmatpush.msra.mxu0 %v67
    %122 = vmatpush.msra.mxu0 %v65
    %123 = vmatpush.msra.mxu0 %v63
    %124 = vmatmul.f32.gmra.mxu0 %v86
    %v125 = vpop.f32.mrf.mxu0
    %v126 = vadd.f32 %v81, %v125
    %127 = vdwg.mxu0
    %128 = vst [vmem:[#allocation8] sm:$0xff] %v106
    %v129 = vmax.f32 %v126, 0.0
    %130 = vst [vmem:[#allocation9] sm:$0xff] %v129
    // Predicated region
    $region26: #{tpu_custom_call.1} parent=1 // pred_check
      _
    $region27: #{tpu_custom_call.1} parent=1 // pred_check_branch
      %132 = sbr.rel (0) target = $region29
    $region28: #{tpu_custom_call.1} parent=1 // pred_region
      %134 = vsyncadd [#allocation4], 0
      %s136 = sshll.u32 [#allocation8], 4
      %s137 = int_to_ptr.vmem [resolvable:$true] %s136
      %s138 = sshll.u32 %s3, 4
      %s139 = int_to_ptr.hbm [resolvable:$true] %s138
      %141 = dma.vmem_to_hbm [thread:$0]  %s137, 128, %s139, [#allocation4]
    $region29: #{tpu_custom_call.1} parent=1 // pred_fallthru
      _
    // Predicated region
    $region30: #{tpu_custom_call.1} parent=1 // pred_check
      _
    $region31: #{tpu_custom_call.1} parent=1 // pred_check_branch
      %143 = sbr.rel (0) target = $region33
    $region32: #{tpu_custom_call.1} parent=1 // pred_region
      %145 = vsyncadd [#allocation10], 0
      %s147 = sshll.u32 [#allocation9], 4
      %s148 = int_to_ptr.vmem [resolvable:$true] %s147
      %s149 = sshll.u32 %s4, 4
      %s150 = int_to_ptr.hbm [resolvable:$true] %s149
      %152 = dma.vmem_to_hbm [thread:$0]  %s148, 128, %s150, [#allocation10]
    $region33: #{tpu_custom_call.1} parent=1 // pred_fallthru
      _
    // Predicated region
    $region34: #{tpu_custom_call.1} parent=1 // pred_check
      _
    $region35: #{tpu_custom_call.1} parent=1 // pred_check_branch
      %154 = sbr.rel (0) target = $region37
    $region36: #{tpu_custom_call.1} parent=1 // pred_region
      %156 = dma.done [#allocation4], 128
    $region37: #{tpu_custom_call.1} parent=1 // pred_fallthru
      _
    // Predicated region
    $region38: #{tpu_custom_call.1} parent=1 // pred_check
      _
    $region39: #{tpu_custom_call.1} parent=1 // pred_check_branch
      %158 = sbr.rel (0) target = $region41
    $region40: #{tpu_custom_call.1} parent=1 // pred_region
      %160 = dma.done [#allocation10], 128
    $region41: #{tpu_custom_call.1} parent=1 // pred_fallthru
      _
    %161 = vsyncpa [#allocation3], 1
    %162 = vsyncpa [#allocation6], 1
    %163 = vsyncpa [#allocation4], 1
    %164 = vsyncpa [#allocation10], 1

</llo_original>
